<compile_context>
chip_gen: v5e
topology: v5e:2x2
jax: 0.10.0
libtpu: 0.0.40
codegen_flags: <defaults>
</compile_context>

<pallas_src>
import functools

import jax
import jax.numpy as jnp
from jax.experimental import pallas as pl
from jax.experimental.pallas import tpu as pltpu

_LANES = 128
_MAX_TILE_ROWS = 1024  # 1024 x 128 x 4B = 512 KiB per f32 buffer


def _sparse_dropout_kernel(vals_ref, bits_ref, out_ref, *, threshold, scale):
    """Dropout on one (tile_rows, 128) tile of the sparse value vector.

    vals_ref: VMEM [tile_rows, 128] (input dtype)
    bits_ref: VMEM uint32[tile_rows, 128] (uniform random bits)
    out_ref:  VMEM [tile_rows, 128] (input dtype)
    """
    # keep probability = 1 - p  <=>  bits >= p * 2^32  (integer compare only).
    keep = bits_ref[...] >= jnp.uint32(threshold)
    v = vals_ref[...].astype(jnp.float32) * jnp.float32(scale)
    out_ref[...] = jnp.where(keep, v, jnp.float32(0.0)).astype(out_ref.dtype)


def sparse_dropout(indices, values, dense_shape, *, p, seed, training=True):
    """JAX equivalent of SparseDropout.forward.

    Returns (indices, dropped_values, dense_shape) -- same representation as
    torch.sparse.FloatTensor(indices, drop_val, shape).
    """
    if (not training) or p <= 0.0:
        return indices, values, dense_shape
    if p >= 1.0:
        # Everything dropped; avoid inf scale.
        return indices, jnp.zeros_like(values), dense_shape

    dtype = values.dtype
    nnz = values.shape[0]

    # Lane-dense layout, tiled along the sublane (row) axis.
    rows = pl.cdiv(nnz, _LANES)
    rows8 = max(8, ((rows + 7) // 8) * 8)          # >= 8 sublanes
    tile_rows = min(_MAX_TILE_ROWS, rows8)          # streaming tile size
    num_tiles = pl.cdiv(rows8, tile_rows)
    rows_padded = num_tiles * tile_rows

    pad = rows_padded * _LANES - nnz
    vals2d = jnp.pad(values, (0, pad)).reshape(rows_padded, _LANES)
    bits2d = jax.random.bits(
        jax.random.PRNGKey(seed), (rows_padded, _LANES), dtype=jnp.uint32
    )

    threshold = min(2**32 - 1, int(round(p * float(2**32))))
    scale = 1.0 / (1.0 - p)

    out2d = pl.pallas_call(
        functools.partial(
            _sparse_dropout_kernel, threshold=threshold, scale=scale
        ),
        out_shape=jax.ShapeDtypeStruct((rows_padded, _LANES), dtype),
        grid=(num_tiles,),
        in_specs=[
            pl.BlockSpec((tile_rows, _LANES), lambda i: (i, 0)),
            pl.BlockSpec((tile_rows, _LANES), lambda i: (i, 0)),
        ],
        out_specs=pl.BlockSpec((tile_rows, _LANES), lambda i: (i, 0)),
        compiler_params=pltpu.CompilerParams(
            dimension_semantics=("parallel",),
        ),
    )(vals2d, bits2d)

    drop_vals = out2d.reshape(-1)[:nnz]
    return indices, drop_vals, dense_shape


if __name__ == "__main__":
    key = jax.random.PRNGKey(0)
    k_idx, k_val = jax.random.split(key)

    # Small synthetic sparse tensor: dense shape (64, 64), nnz = 1024 nonzeros.
    dense_shape = (64, 64)
    nnz = 1024
    indices = jax.random.randint(k_idx, (2, nnz), 0, 64, dtype=jnp.int32)
    values = jax.random.normal(k_val, (nnz,), dtype=jnp.float32)

    p = 0.5
    out_indices, out_values, out_shape = sparse_dropout(
        indices, values, dense_shape, p=p, seed=1234, training=True
    )
    jax.block_until_ready(out_values)

    # Sanity checks: shapes/dtype preserved, survivors scaled by 1/(1-p),
    # dropped entries zeroed, eval mode is identity.
    assert out_indices.shape == (2, nnz)
    assert out_values.shape == (nnz,)
    assert out_values.dtype == values.dtype
    kept = out_values != 0.0
    expected_kept = values[kept] / (1.0 - p)
    assert jnp.allclose(out_values[kept], expected_kept, rtol=1e-6, atol=1e-6)

    _, eval_vals, _ = sparse_dropout(
        indices, values, dense_shape, p=p, seed=1234, training=False
    )
    assert jnp.array_equal(eval_vals, values)

    print("KERNEL_OK")
</pallas_src>

<mosaic_0001>
module attributes {stable_mosaic.version = 11 : i64} {
  func.func @_sparse_dropout_kernel(%arg0: i32, %arg1: memref<8x128xf32, #tpu.memory_space<vmem>>, %arg2: memref<8x128xi32, #tpu.memory_space<vmem>>, %arg3: memref<8x128xf32, #tpu.memory_space<vmem>>) attributes {dimension_semantics = [#tpu.dimension_semantics<parallel>], iteration_bounds = array<i64: 1>, scalar_prefetch = 0 : i64, scratch_operands = 0 : i64, tpu.core_type = #tpu.core_type<tc>, window_params = [{transform_indices = @transform_0, window_bounds = array<i64: 8, 128>}, {transform_indices = @transform_1, window_bounds = array<i64: 8, 128>}, {transform_indices = @transform_2, window_bounds = array<i64: 8, 128>}]} {
    %c0 = arith.constant 0 : index
    %c0_0 = arith.constant 0 : index
    %0 = vector.load %arg2[%c0, %c0_0] : memref<8x128xi32, #tpu.memory_space<vmem>>, vector<8x128xi32>
    %c-2147483648_i32 = arith.constant -2147483648 : i32
    %1 = vector.broadcast %c-2147483648_i32 : i32 to vector<8x128xi32>
    %2 = arith.cmpi uge, %0, %1 : vector<8x128xi32>
    %c0_1 = arith.constant 0 : index
    %c0_2 = arith.constant 0 : index
    %3 = vector.load %arg1[%c0_1, %c0_2] : memref<8x128xf32, #tpu.memory_space<vmem>>, vector<8x128xf32>
    %cst = arith.constant 2.000000e+00 : f32
    %4 = vector.broadcast %cst : f32 to vector<8x128xf32>
    %5 = arith.mulf %3, %4 : vector<8x128xf32>
    %cst_3 = arith.constant 0.000000e+00 : f32
    %6 = vector.broadcast %cst_3 : f32 to vector<8x128xf32>
    %7 = arith.select %2, %5, %6 : vector<8x128xi1>, vector<8x128xf32>
    %c0_4 = arith.constant 0 : index
    %c0_5 = arith.constant 0 : index
    %8 = vector.load %arg3[%c0_4, %c0_5] : memref<8x128xf32, #tpu.memory_space<vmem>>, vector<8x128xf32>
    tpu.vector_store %arg3[%c0_4, %c0_5], %7 {strides = array<i32>} : memref<8x128xf32, #tpu.memory_space<vmem>>, vector<8x128xf32>,
    return
  }
  func.func @transform_0(%arg0: i32) -> (i32, i32) {
    %c0_i32 = arith.constant 0 : i32
    %c0_i32_0 = arith.constant 0 : i32
    return %arg0, %c0_i32 : i32, i32
  }
  func.func @transform_1(%arg0: i32) -> (i32, i32) {
    %c0_i32 = arith.constant 0 : i32
    %c0_i32_0 = arith.constant 0 : i32
    return %arg0, %c0_i32 : i32, i32
  }
  func.func @transform_2(%arg0: i32) -> (i32, i32) {
    %c0_i32 = arith.constant 0 : i32
    %c0_i32_0 = arith.constant 0 : i32
    return %arg0, %c0_i32 : i32, i32
  }
}

</mosaic_0001>

<llo_original>
// kernel: tpu_custom_call.1
$region0: #{tpu_custom_call.1}
  #allocation0 [shape = 'u32[]', space=smem, size = 0x4, offset = 0x4, fixed_abs, tag = 'smem constant byte address 0x4 - core index']
  #allocation1 [shape = 'u32[72,128]{1,0:T(1,128)}', space=vmem, size = 0x9000, scoped, tag = 'internal scratch']
  %s0 = inlined_call_operand.hbm [shape: f32[8,128], index: 0, kind: input, shape index: {}]
  %s1 = inlined_call_operand.hbm [shape: u32[8,128], index: 1, kind: input, shape index: {}]
  %s2 = inlined_call_operand.hbm [shape: f32[8,128], index: 2, kind: output, shape index: {}]
  %s3 = sld [smem:[#allocation0]]
  $region26: #{tpu_custom_call.1} parent=0
    _
  %s5 = ssub.s32 1, %s3
  %s6 = scalar_select 0, %s5, %s3
  $region1: #{tpu_custom_call.1} parent=0
    #allocation2 [shape = 'u8[4096]{0}', space=vmem, size = 0x1000, scoped, tag = 'input window, operand 0, single buffered']
    #allocation3 [shape = 's32[1]{0}', space=sflag, size = 0x4, scoped, tag = 'scoped memory for tpu_custom_call.1']
    #allocation4 [shape = 's32[1]{0}', space=sflag, size = 0x4, scoped, tag = 'scoped memory for tpu_custom_call.1']
    #allocation5 [shape = 'u8[4096]{0}', space=vmem, size = 0x1000, scoped, tag = 'input window, operand 1, single buffered']
    #allocation6 [shape = 's32[1]{0}', space=sflag, size = 0x4, scoped, tag = 'scoped memory for tpu_custom_call.1']
    #allocation7 [shape = 'u8[4096]{0}', space=vmem, size = 0x1000, scoped, tag = 'output window, operand 0, single buffered']
    %7 = vsyncpa [#allocation3], 0
    %8 = vsyncpa [#allocation6], 0
    %9 = vsyncpa [#allocation4], 0
    // Predicated region
    $region2: #{tpu_custom_call.1} parent=1 // pred_check
      _
    $region3: #{tpu_custom_call.1} parent=1 // pred_check_branch
      %11 = sbr.rel (0) target = $region5
    $region4: #{tpu_custom_call.1} parent=1 // pred_region
      %13 = vsyncadd [#allocation3], 0
      %s15 = sshll.u32 %s0, 4
      %s16 = int_to_ptr.hbm [resolvable:$true] %s15
      %s17 = sshll.u32 [#allocation2], 4
      %s18 = int_to_ptr.vmem [resolvable:$true] %s17
      %20 = dma.hbm_to_vmem [thread:$0]  %s16, 128, %s18, [#allocation3]
    $region5: #{tpu_custom_call.1} parent=1 // pred_fallthru
      _
    // Predicated region
    $region6: #{tpu_custom_call.1} parent=1 // pred_check
      _
    $region7: #{tpu_custom_call.1} parent=1 // pred_check_branch
      %22 = sbr.rel (0) target = $region9
    $region8: #{tpu_custom_call.1} parent=1 // pred_region
      %24 = vsyncadd [#allocation6], 0
      %s26 = sshll.u32 %s1, 4
      %s27 = int_to_ptr.hbm [resolvable:$true] %s26
      %s28 = sshll.u32 [#allocation5], 4
      %s29 = int_to_ptr.vmem [resolvable:$true] %s28
      %31 = dma.hbm_to_vmem [thread:$0]  %s27, 128, %s29, [#allocation6]
    $region9: #{tpu_custom_call.1} parent=1 // pred_fallthru
      _
    // Predicated region
    $region10: #{tpu_custom_call.1} parent=1 // pred_check
      _
    $region11: #{tpu_custom_call.1} parent=1 // pred_check_branch
      %33 = sbr.rel (0) target = $region13
    $region12: #{tpu_custom_call.1} parent=1 // pred_region
      %35 = dma.done [#allocation3], 128
    $region13: #{tpu_custom_call.1} parent=1 // pred_fallthru
      _
    // Predicated region
    $region14: #{tpu_custom_call.1} parent=1 // pred_check
      _
    $region15: #{tpu_custom_call.1} parent=1 // pred_check_branch
      %37 = sbr.rel (0) target = $region17
    $region16: #{tpu_custom_call.1} parent=1 // pred_region
      %39 = dma.done [#allocation6], 128
    $region17: #{tpu_custom_call.1} parent=1 // pred_fallthru
      _
    %v40 = vld [vmem:[#allocation5] sm:$0xff]
    %v41 = vadd.s32 %v40, 2147483648
    %vm43 = vcmp.ge.s32.totalorder %v41, 0
    %v44 = vld [vmem:[#allocation2] sm:$0xff]
    %v45 = vmul.f32 %v44, 2.0
    %v46 = vsel %vm43, %v45, 0.0
    %47 = vst [vmem:[#allocation7] sm:$0xff] %v46
    // Predicated region
    $region18: #{tpu_custom_call.1} parent=1 // pred_check
      _
    $region19: #{tpu_custom_call.1} parent=1 // pred_check_branch
      %49 = sbr.rel (0) target = $region21
    $region20: #{tpu_custom_call.1} parent=1 // pred_region
      %51 = vsyncadd [#allocation4], 0
      %s53 = sshll.u32 [#allocation7], 4
      %s54 = int_to_ptr.vmem [resolvable:$true] %s53
      %s55 = sshll.u32 %s2, 4
      %s56 = int_to_ptr.hbm [resolvable:$true] %s55
      %58 = dma.vmem_to_hbm [thread:$0]  %s54, 128, %s56, [#allocation4]
    $region21: #{tpu_custom_call.1} parent=1 // pred_fallthru
      _
    // Predicated region
    $region22: #{tpu_custom_call.1} parent=1 // pred_check
      _
    $region23: #{tpu_custom_call.1} parent=1 // pred_check_branch
      %60 = sbr.rel (0) target = $region25
    $region24: #{tpu_custom_call.1} parent=1 // pred_region
      %62 = dma.done [#allocation4], 128
    $region25: #{tpu_custom_call.1} parent=1 // pred_fallthru
      _
    %63 = vsyncpa [#allocation3], 1
    %64 = vsyncpa [#allocation6], 1
    %65 = vsyncpa [#allocation4], 1

</llo_original>
